<compile_context>
chip_gen: v6e
topology: v6e:2x2x1
jax: 0.10.0
libtpu: 0.0.40
codegen_flags: <defaults>
</compile_context>

<pallas_src>
import functools

import jax
import jax.numpy as jnp
from jax.experimental import pallas as pl
from jax.experimental.pallas import tpu as pltpu

LANE = 128
SUBLANE = 8


def _round_up(n, m):
    return ((n + m - 1) // m) * m


def mlp_kernel(x_ref, w1_ref, b1_ref, w2_ref, b2_ref, w3_ref, b3_ref,
               w4_ref, b4_ref, o_ref):
    """One batch tile of the 4-layer MLP (fc -> ReLU x3 -> fc).

    Matmul operands are in the weights' compute dtype (f32 or bf16); the x tile
    is cast in-kernel (cheaper than a wrapper-side cast: no extra HBM pass).
    Accumulation, bias add and ReLU stay in f32 (safe on v5e's f32-only VPU).
    """
    cdt = w1_ref.dtype

    h = jnp.dot(x_ref[...].astype(cdt), w1_ref[...],
                preferred_element_type=jnp.float32) + b1_ref[...]
    h = jnp.maximum(h, 0.0)

    h = jnp.dot(h.astype(cdt), w2_ref[...],
                preferred_element_type=jnp.float32) + b2_ref[...]
    h = jnp.maximum(h, 0.0)

    h = jnp.dot(h.astype(cdt), w3_ref[...],
                preferred_element_type=jnp.float32) + b3_ref[...]
    h = jnp.maximum(h, 0.0)

    h = jnp.dot(h.astype(cdt), w4_ref[...],
                preferred_element_type=jnp.float32) + b4_ref[...]

    o_ref[...] = h.astype(o_ref.dtype)


def prepare_params(params, compute_dtype=jnp.bfloat16):
    """One-time prep: pad internal hidden dims to 128 lanes and cast weights.

    Padding is numerically exact (padded activation lanes are zero and feed
    zero weight rows of the next layer).  num_features (K of layer 1) and
    num_output (N of layer 4) are intentionally left unpadded so the streaming
    x DMA and the output store carry no padded bytes.  bf16 operands run at
    native MXU rate on v5e, v6e and v7x; biases stay f32 (f32 bias add / ReLU).
    """
    num_features, h1 = params["w1"].shape
    h2 = params["w2"].shape[1]
    h3 = params["w3"].shape[1]
    num_output = params["w4"].shape[1]

    h1p = _round_up(h1, LANE)
    h2p = _round_up(h2, LANE)
    h3p = _round_up(h3, LANE)

    def pad_w(w, rp, cp):
        r, c = w.shape
        return jnp.pad(w, ((0, rp - r), (0, cp - c))).astype(compute_dtype)

    def pad_b(b, cp):
        c = b.shape[-1]
        return jnp.pad(b.reshape(1, c), ((0, 0), (0, cp - c))).astype(jnp.float32)

    return {
        "w1": pad_w(params["w1"], num_features, h1p), "b1": pad_b(params["b1"], h1p),
        "w2": pad_w(params["w2"], h1p, h2p),          "b2": pad_b(params["b2"], h2p),
        "w3": pad_w(params["w3"], h2p, h3p),          "b3": pad_b(params["b3"], h3p),
        "w4": pad_w(params["w4"], h3p, num_output),   "b4": pad_b(params["b4"], num_output),
    }


def _pick_batch_tile(B, block_batch):
    if block_batch is None:
        # Aim for ~8 grid steps: >=4 steps per TensorCore after v7x megacore
        # sharding (keeps the x-tile DMA double-buffered on both cores) while
        # keeping the ~0.35us/step fixed overhead small on single-TC v5e/v6e.
        block_batch = max(SUBLANE, min(512, _round_up(pl.cdiv(B, 8), SUBLANE)))
    return _round_up(min(block_batch, _round_up(B, SUBLANE)), SUBLANE)


@functools.partial(jax.jit, static_argnames=("block_batch",))
def mlp_forward(x, prepared, block_batch=None):
    """x: (B, num_features) f32.  prepared: output of prepare_params()."""
    B, num_features = x.shape
    w1, b1 = prepared["w1"], prepared["b1"]
    w2, b2 = prepared["w2"], prepared["b2"]
    w3, b3 = prepared["w3"], prepared["b3"]
    w4, b4 = prepared["w4"], prepared["b4"]
    assert w1.shape[0] == num_features
    h1p, h2p, h3p = w1.shape[1], w2.shape[1], w3.shape[1]
    num_output = w4.shape[1]

    # Batch tiling: multiple of 8 sublanes; pad only trailing rows (if any).
    tb = _pick_batch_tile(B, block_batch)
    Bp = _round_up(B, tb)
    xp = x if Bp == B else jnp.pad(x, ((0, Bp - B), (0, 0)))
    grid = (Bp // tb,)

    weights = (w1, b1, w2, b2, w3, b3, w4, b4)
    # Advisory cost hint: true per-call traffic / flops (not inflated).
    flops = 2 * B * (num_features * h1p + h1p * h2p + h2p * h3p + h3p * num_output)
    bytes_accessed = (x.size * x.dtype.itemsize
                      + sum(a.size * a.dtype.itemsize for a in weights)
                      + B * num_output * 4)
    cost = pl.CostEstimate(flops=flops, transcendentals=0,
                           bytes_accessed=bytes_accessed)

    out = pl.pallas_call(
        mlp_kernel,
        out_shape=jax.ShapeDtypeStruct((Bp, num_output), jnp.float32),
        grid_spec=pltpu.PrefetchScalarGridSpec(
            num_scalar_prefetch=0,
            grid=grid,
            in_specs=[
                # x streams one (tb, num_features) tile per grid step; the
                # full-extent last dim (<128) is legal and keeps the DMA tight.
                pl.BlockSpec((tb, num_features), lambda i: (i, 0)),
                # Weights / biases: constant index_map -> VMEM-resident across
                # all batch tiles (DMA'd once).
                pl.BlockSpec((num_features, h1p), lambda i: (0, 0)),
                pl.BlockSpec((1, h1p), lambda i: (0, 0)),
                pl.BlockSpec((h1p, h2p), lambda i: (0, 0)),
                pl.BlockSpec((1, h2p), lambda i: (0, 0)),
                pl.BlockSpec((h2p, h3p), lambda i: (0, 0)),
                pl.BlockSpec((1, h3p), lambda i: (0, 0)),
                pl.BlockSpec((h3p, num_output), lambda i: (0, 0)),
                pl.BlockSpec((1, num_output), lambda i: (0, 0)),
            ],
            # Store only the real num_output columns (small masked vst beats an
            # 8x over-wide HBM writeback + extra slice for a 16-wide output).
            out_specs=pl.BlockSpec((tb, num_output), lambda i: (i, 0)),
        ),
        compiler_params=pltpu.CompilerParams(
            dimension_semantics=("parallel",),
        ),
        cost_estimate=cost,
    )(xp, *weights)

    return out if Bp == B else out[:B]


def init_params(key, num_features, num_hidden1, num_hidden2, num_hidden3, num_output):
    """Deterministic init mimicking nn.Linear's uniform(-1/sqrt(fan_in), 1/sqrt(fan_in)).
    Weights stored as (in_features, out_features) = torch_weight.T."""
    dims = [(num_features, num_hidden1),
            (num_hidden1, num_hidden2),
            (num_hidden2, num_hidden3),
            (num_hidden3, num_output)]
    params = {}
    keys = jax.random.split(key, 2 * len(dims))
    for i, (fan_in, fan_out) in enumerate(dims):
        bound = 1.0 / jnp.sqrt(jnp.float32(fan_in))
        w = jax.random.uniform(keys[2 * i], (fan_in, fan_out),
                               dtype=jnp.float32, minval=-bound, maxval=bound)
        b = jax.random.uniform(keys[2 * i + 1], (1, fan_out),
                               dtype=jnp.float32, minval=-bound, maxval=bound)
        params[f"w{i+1}"] = w
        params[f"b{i+1}"] = b
    return params


def reference_forward(x, params):
    h = jnp.maximum(x @ params["w1"] + params["b1"], 0.0)
    h = jnp.maximum(h @ params["w2"] + params["b2"], 0.0)
    h = jnp.maximum(h @ params["w3"] + params["b3"], 0.0)
    return h @ params["w4"] + params["b4"]


if __name__ == "__main__":
    # Small shapes consistent with the module (plain MLP on feature vectors);
    # batch chosen so the auto tile (tb=32) gives 8 grid steps.
    batch = 256
    num_features, num_hidden1, num_hidden2, num_hidden3, num_output = 32, 64, 64, 32, 16

    key = jax.random.PRNGKey(0)
    key_x, key_p = jax.random.split(key)
    x = jax.random.normal(key_x, (batch, num_features), dtype=jnp.float32)
    params = init_params(key_p, num_features, num_hidden1, num_hidden2,
                         num_hidden3, num_output)

    ref = reference_forward(x, params)

    # f32 MXU-operand path (exact vs reference up to accumulation order).
    prep_f32 = prepare_params(params, compute_dtype=jnp.float32)
    out = jax.block_until_ready(mlp_forward(x, prep_f32))
    assert out.shape == (batch, num_output)
    assert jnp.allclose(out, ref, atol=1e-4, rtol=1e-4)

    # bf16 MXU-operand path (native MXU rate on v5e/v6e/v7x), f32 accumulation
    # and f32 elementwise.
    prep_bf16 = prepare_params(params, compute_dtype=jnp.bfloat16)
    out_bf16 = jax.block_until_ready(mlp_forward(x, prep_bf16))
    assert out_bf16.shape == (batch, num_output)
    assert jnp.allclose(out_bf16, ref, atol=1e-1, rtol=1e-1)

    print("KERNEL_OK")
</pallas_src>

<mosaic_0001>
module attributes {stable_mosaic.version = 11 : i64} {
  func.func @mlp_kernel(%arg0: i32, %arg1: memref<32x32xf32, #tpu.memory_space<vmem>>, %arg2: memref<32x128xf32, #tpu.memory_space<vmem>>, %arg3: memref<1x128xf32, #tpu.memory_space<vmem>>, %arg4: memref<128x128xf32, #tpu.memory_space<vmem>>, %arg5: memref<1x128xf32, #tpu.memory_space<vmem>>, %arg6: memref<128x128xf32, #tpu.memory_space<vmem>>, %arg7: memref<1x128xf32, #tpu.memory_space<vmem>>, %arg8: memref<128x16xf32, #tpu.memory_space<vmem>>, %arg9: memref<1x16xf32, #tpu.memory_space<vmem>>, %arg10: memref<32x16xf32, #tpu.memory_space<vmem>>) attributes {dimension_semantics = [#tpu.dimension_semantics<parallel>], iteration_bounds = array<i64: 8>, scalar_prefetch = 0 : i64, scratch_operands = 0 : i64, tpu.core_type = #tpu.core_type<tc>, window_params = [{transform_indices = @transform_0, window_bounds = array<i64: 32, 32>}, {pipeline_mode = #tpu.pipeline_mode<synchronous>, transform_indices = @transform_1, window_bounds = array<i64: 32, 128>}, {pipeline_mode = #tpu.pipeline_mode<synchronous>, transform_indices = @transform_2, window_bounds = array<i64: 1, 128>}, {pipeline_mode = #tpu.pipeline_mode<synchronous>, transform_indices = @transform_3, window_bounds = array<i64: 128, 128>}, {pipeline_mode = #tpu.pipeline_mode<synchronous>, transform_indices = @transform_4, window_bounds = array<i64: 1, 128>}, {pipeline_mode = #tpu.pipeline_mode<synchronous>, transform_indices = @transform_5, window_bounds = array<i64: 128, 128>}, {pipeline_mode = #tpu.pipeline_mode<synchronous>, transform_indices = @transform_6, window_bounds = array<i64: 1, 128>}, {pipeline_mode = #tpu.pipeline_mode<synchronous>, transform_indices = @transform_7, window_bounds = array<i64: 128, 16>}, {pipeline_mode = #tpu.pipeline_mode<synchronous>, transform_indices = @transform_8, window_bounds = array<i64: 1, 16>}, {transform_indices = @transform_9, window_bounds = array<i64: 32, 16>}]} {
    %c0 = arith.constant 0 : index
    %c0_0 = arith.constant 0 : index
    %0 = vector.load %arg1[%c0, %c0_0] : memref<32x32xf32, #tpu.memory_space<vmem>>, vector<32x32xf32>
    %c0_1 = arith.constant 0 : index
    %c0_2 = arith.constant 0 : index
    %1 = vector.load %arg2[%c0_1, %c0_2] : memref<32x128xf32, #tpu.memory_space<vmem>>, vector<32x128xf32>
    %cst = arith.constant dense<0.000000e+00> : vector<32x128xf32>
    %2 = tpu.matmul %0, %1, %cst {dimension_numbers = #tpu.dot_dimension_numbers<[1], [0], [0], [1], [0, 0, 1, 1], [], []>} : vector<32x32xf32>, vector<32x128xf32>, vector<32x128xf32> -> vector<32x128xf32>
    %c0_3 = arith.constant 0 : index
    %c0_4 = arith.constant 0 : index
    %3 = vector.load %arg3[%c0_3, %c0_4] : memref<1x128xf32, #tpu.memory_space<vmem>>, vector<1x128xf32>
    %4 = vector.broadcast %3 : vector<1x128xf32> to vector<32x128xf32>
    %5 = arith.addf %2, %4 : vector<32x128xf32>
    %cst_5 = arith.constant 0.000000e+00 : f32
    %6 = vector.broadcast %cst_5 : f32 to vector<32x128xf32>
    %7 = arith.maximumf %5, %6 : vector<32x128xf32>
    %c0_6 = arith.constant 0 : index
    %c0_7 = arith.constant 0 : index
    %8 = vector.load %arg4[%c0_6, %c0_7] : memref<128x128xf32, #tpu.memory_space<vmem>>, vector<128x128xf32>
    %cst_8 = arith.constant dense<0.000000e+00> : vector<32x128xf32>
    %9 = tpu.matmul %7, %8, %cst_8 {dimension_numbers = #tpu.dot_dimension_numbers<[1], [0], [0], [1], [0, 0, 1, 1], [], []>} : vector<32x128xf32>, vector<128x128xf32>, vector<32x128xf32> -> vector<32x128xf32>
    %c0_9 = arith.constant 0 : index
    %c0_10 = arith.constant 0 : index
    %10 = vector.load %arg5[%c0_9, %c0_10] : memref<1x128xf32, #tpu.memory_space<vmem>>, vector<1x128xf32>
    %11 = vector.broadcast %10 : vector<1x128xf32> to vector<32x128xf32>
    %12 = arith.addf %9, %11 : vector<32x128xf32>
    %cst_11 = arith.constant 0.000000e+00 : f32
    %13 = vector.broadcast %cst_11 : f32 to vector<32x128xf32>
    %14 = arith.maximumf %12, %13 : vector<32x128xf32>
    %c0_12 = arith.constant 0 : index
    %c0_13 = arith.constant 0 : index
    %15 = vector.load %arg6[%c0_12, %c0_13] : memref<128x128xf32, #tpu.memory_space<vmem>>, vector<128x128xf32>
    %cst_14 = arith.constant dense<0.000000e+00> : vector<32x128xf32>
    %16 = tpu.matmul %14, %15, %cst_14 {dimension_numbers = #tpu.dot_dimension_numbers<[1], [0], [0], [1], [0, 0, 1, 1], [], []>} : vector<32x128xf32>, vector<128x128xf32>, vector<32x128xf32> -> vector<32x128xf32>
    %c0_15 = arith.constant 0 : index
    %c0_16 = arith.constant 0 : index
    %17 = vector.load %arg7[%c0_15, %c0_16] : memref<1x128xf32, #tpu.memory_space<vmem>>, vector<1x128xf32>
    %18 = vector.broadcast %17 : vector<1x128xf32> to vector<32x128xf32>
    %19 = arith.addf %16, %18 : vector<32x128xf32>
    %cst_17 = arith.constant 0.000000e+00 : f32
    %20 = vector.broadcast %cst_17 : f32 to vector<32x128xf32>
    %21 = arith.maximumf %19, %20 : vector<32x128xf32>
    %c0_18 = arith.constant 0 : index
    %c0_19 = arith.constant 0 : index
    %22 = vector.load %arg8[%c0_18, %c0_19] : memref<128x16xf32, #tpu.memory_space<vmem>>, vector<128x16xf32>
    %cst_20 = arith.constant dense<0.000000e+00> : vector<32x16xf32>
    %23 = tpu.matmul %21, %22, %cst_20 {dimension_numbers = #tpu.dot_dimension_numbers<[1], [0], [0], [1], [0, 0, 1, 1], [], []>} : vector<32x128xf32>, vector<128x16xf32>, vector<32x16xf32> -> vector<32x16xf32>
    %c0_21 = arith.constant 0 : index
    %c0_22 = arith.constant 0 : index
    %24 = vector.load %arg9[%c0_21, %c0_22] : memref<1x16xf32, #tpu.memory_space<vmem>>, vector<1x16xf32>
    %25 = vector.broadcast %24 : vector<1x16xf32> to vector<32x16xf32>
    %26 = arith.addf %23, %25 : vector<32x16xf32>
    %c0_23 = arith.constant 0 : index
    %c0_24 = arith.constant 0 : index
    %27 = vector.load %arg10[%c0_23, %c0_24] : memref<32x16xf32, #tpu.memory_space<vmem>>, vector<32x16xf32>
    tpu.vector_store %arg10[%c0_23, %c0_24], %26 {strides = array<i32>} : memref<32x16xf32, #tpu.memory_space<vmem>>, vector<32x16xf32>,
    return
  }
  func.func @transform_0(%arg0: i32) -> (i32, i32) {
    %c0_i32 = arith.constant 0 : i32
    %c0_i32_0 = arith.constant 0 : i32
    return %arg0, %c0_i32 : i32, i32
  }
  func.func @transform_1(%arg0: i32) -> (i32, i32) {
    %c0_i32 = arith.constant 0 : i32
    %c0_i32_0 = arith.constant 0 : i32
    %c0_i32_1 = arith.constant 0 : i32
    return %c0_i32, %c0_i32_0 : i32, i32
  }
  func.func @transform_2(%arg0: i32) -> (i32, i32) {
    %c0_i32 = arith.constant 0 : i32
    %c0_i32_0 = arith.constant 0 : i32
    %c0_i32_1 = arith.constant 0 : i32
    return %c0_i32, %c0_i32_0 : i32, i32
  }
  func.func @transform_3(%arg0: i32) -> (i32, i32) {
    %c0_i32 = arith.constant 0 : i32
    %c0_i32_0 = arith.constant 0 : i32
    %c0_i32_1 = arith.constant 0 : i32
    return %c0_i32, %c0_i32_0 : i32, i32
  }
  func.func @transform_4(%arg0: i32) -> (i32, i32) {
    %c0_i32 = arith.constant 0 : i32
    %c0_i32_0 = arith.constant 0 : i32
    %c0_i32_1 = arith.constant 0 : i32
    return %c0_i32, %c0_i32_0 : i32, i32
  }
  func.func @transform_5(%arg0: i32) -> (i32, i32) {
    %c0_i32 = arith.constant 0 : i32
    %c0_i32_0 = arith.constant 0 : i32
    %c0_i32_1 = arith.constant 0 : i32
    return %c0_i32, %c0_i32_0 : i32, i32
  }
  func.func @transform_6(%arg0: i32) -> (i32, i32) {
    %c0_i32 = arith.constant 0 : i32
    %c0_i32_0 = arith.constant 0 : i32
    %c0_i32_1 = arith.constant 0 : i32
    return %c0_i32, %c0_i32_0 : i32, i32
  }
  func.func @transform_7(%arg0: i32) -> (i32, i32) {
    %c0_i32 = arith.constant 0 : i32
    %c0_i32_0 = arith.constant 0 : i32
    %c0_i32_1 = arith.constant 0 : i32
    return %c0_i32, %c0_i32_0 : i32, i32
  }
  func.func @transform_8(%arg0: i32) -> (i32, i32) {
    %c0_i32 = arith.constant 0 : i32
    %c0_i32_0 = arith.constant 0 : i32
    %c0_i32_1 = arith.constant 0 : i32
    return %c0_i32, %c0_i32_0 : i32, i32
  }
  func.func @transform_9(%arg0: i32) -> (i32, i32) {
    %c0_i32 = arith.constant 0 : i32
    %c0_i32_0 = arith.constant 0 : i32
    return %arg0, %c0_i32 : i32, i32
  }
}

</mosaic_0001>

<llo_original>
// kernel: mlp_forward.1
$region0: #{mlp_forward.1}
  #allocation0 [shape = 'u32[]', space=smem, size = 0x4, offset = 0x4, fixed_abs, tag = 'smem constant byte address 0x4 - core index']
  #allocation1 [shape = 'u32[144,128]{1,0:T(1,128)}', space=vmem, size = 0x12000, scoped, tag = 'internal scratch']
  %s0 = inlined_call_operand.vmem [shape: f32[256,32], index: 0, kind: input, shape index: {}]
  %s1 = inlined_call_operand.vmem [shape: f32[32,128], index: 1, kind: input, shape index: {}]
  %s2 = inlined_call_operand.vmem [shape: f32[1,128], index: 2, kind: input, shape index: {}]
  %s3 = inlined_call_operand.vmem [shape: f32[128,128], index: 3, kind: input, shape index: {}]
  %s4 = inlined_call_operand.vmem [shape: f32[1,128], index: 4, kind: input, shape index: {}]
  %s5 = inlined_call_operand.vmem [shape: f32[128,128], index: 5, kind: input, shape index: {}]
  %s6 = inlined_call_operand.vmem [shape: f32[1,128], index: 6, kind: input, shape index: {}]
  %s7 = inlined_call_operand.vmem [shape: f32[128,16], index: 7, kind: input, shape index: {}]
  %s8 = inlined_call_operand.vmem [shape: f32[1,16], index: 8, kind: input, shape index: {}]
  %s9 = inlined_call_operand.vmem [shape: f32[256,16], index: 9, kind: output, shape index: {}]
  %s10 = sld [smem:[#allocation0]]
  $region69: #{mlp_forward.1} parent=0
    _
  %s12 = ssub.s32 1, %s10
  %s13 = scalar_select 0, %s12, %s10
  loop: start=0, step=1, limit=10
  $region2: #{mlp_forward.1} parent=0 // loop_pre_header
    _
  $region3: #{mlp_forward.1} parent=0 // loop_header
    %s15 = sphi 0, %s19
    %p16 = scmp.ge.s32.totalorder %s15, 10
    %s25 = sphi 0, %s27
    %s28 = sphi 0, %s25
    %s29 = sphi 0, %s28
    %s45 = sphi 0, %s29
    %s49 = sphi 0, %s49
    %s51 = sphi 0, %s49
    %s52 = sphi 0, %s51
    %s66 = sphi 0, %s52
    %s70 = sphi 0, %s70
    %s72 = sphi 0, %s70
    %s73 = sphi 0, %s72
    %s87 = sphi 0, %s73
    %s91 = sphi 0, %s91
    %s93 = sphi 0, %s91
    %s94 = sphi 0, %s93
    %s108 = sphi 0, %s94
    %s112 = sphi 0, %s112
    %s114 = sphi 0, %s112
    %s115 = sphi 0, %s114
    %s129 = sphi 0, %s115
    %s133 = sphi 0, %s133
    %s135 = sphi 0, %s133
    %s136 = sphi 0, %s135
    %s150 = sphi 0, %s136
    %s154 = sphi 0, %s154
    %s156 = sphi 0, %s154
    %s157 = sphi 0, %s156
    %s171 = sphi 0, %s157
    %s175 = sphi 0, %s175
    %s177 = sphi 0, %s175
    %s178 = sphi 0, %s177
    %s192 = sphi 0, %s178
    %s196 = sphi 0, %s196
    %s198 = sphi 0, %s196
    %s199 = sphi 0, %s198
    %s213 = sphi 0, %s199
    %s219 = sphi 0, %s221
    %s222 = sphi 0, %s219
    %s223 = sphi 0, %s222
    %s239 = sphi 0, %s223
  $region4: #{mlp_forward.1} parent=0 // loop_header_branch
    %18 = sbr.rel (%p16) target = $region8
  $region5: #{mlp_forward.1} parent=0 // loop_body
    %s20 = ssub.s32 %s15, 1
    %s21 = ssub.s32 %s15, 2
    %s22 = sadd.s32 %s15, 1
    %s23 = ssub.s32 %s15, %s22
    %p24 = scmp.eq.s32.totalorder %s23, 0
    %s26 = sadd.s32 %s25, 1
    %s27 = scalar_select %p24, %s25, %s26
    %p30 = pneg %p24
    %p31 = scmp.eq.s32.totalorder %s15, 7
    %p32 = por %p30, %p31
    %p33 = scmp.ne.s32.totalorder %s25, %s28
    %p34 = scmp.eq.s32.totalorder %s15, 0
    %p35 = por %p33, %p34
    %p36 = scmp.ne.s32.totalorder %s25, %s28
    %p37 = scmp.eq.s32.totalorder %s20, 7
    %p38 = por %p36, %p37
    %p39 = scmp.ne.s32.totalorder %s28, %s29
    %p40 = scmp.eq.s32.totalorder %s20, 0
    %p41 = por %p39, %p40
    %p42 = scmp.ne.s32.totalorder %s28, %s29
    %p43 = scmp.eq.s32.totalorder %s21, 7
    %p44 = por %p42, %p43
    %p46 = scmp.ne.s32.totalorder %s29, %s45
    %p47 = scmp.eq.s32.totalorder %s21, 0
    %p48 = por %p46, %p47
    %s50 = sadd.s32 %s49, 1
    %p53 = scmp.eq.s32.totalorder %s15, 7
    %p54 = scmp.ne.s32.totalorder %s49, %s51
    %p55 = scmp.eq.s32.totalorder %s15, 0
    %p56 = por %p54, %p55
    %p57 = scmp.ne.s32.totalorder %s49, %s51
    %p58 = scmp.eq.s32.totalorder %s20, 7
    %p59 = por %p57, %p58
    %p60 = scmp.ne.s32.totalorder %s51, %s52
    %p61 = scmp.eq.s32.totalorder %s20, 0
    %p62 = por %p60, %p61
    %p63 = scmp.ne.s32.totalorder %s51, %s52
    %p64 = scmp.eq.s32.totalorder %s21, 7
    %p65 = por %p63, %p64
    %p67 = scmp.ne.s32.totalorder %s52, %s66
    %p68 = scmp.eq.s32.totalorder %s21, 0
    %p69 = por %p67, %p68
    %s71 = sadd.s32 %s70, 1
    %p74 = scmp.eq.s32.totalorder %s15, 7
    %p75 = scmp.ne.s32.totalorder %s70, %s72
    %p76 = scmp.eq.s32.totalorder %s15, 0
    %p77 = por %p75, %p76
    %p78 = scmp.ne.s32.totalorder %s70, %s72
    %p79 = scmp.eq.s32.totalorder %s20, 7
    %p80 = por %p78, %p79
    %p81 = scmp.ne.s32.totalorder %s72, %s73
    %p82 = scmp.eq.s32.totalorder %s20, 0
    %p83 = por %p81, %p82
    %p84 = scmp.ne.s32.totalorder %s72, %s73
    %p85 = scmp.eq.s32.totalorder %s21, 7
    %p86 = por %p84, %p85
    %p88 = scmp.ne.s32.totalorder %s73, %s87
    %p89 = scmp.eq.s32.totalorder %s21, 0
    %p90 = por %p88, %p89
    %s92 = sadd.s32 %s91, 1
    %p95 = scmp.eq.s32.totalorder %s15, 7
    %p96 = scmp.ne.s32.totalorder %s91, %s93
    %p97 = scmp.eq.s32.totalorder %s15, 0
    %p98 = por %p96, %p97
    %p99 = scmp.ne.s32.totalorder %s91, %s93
    %p100 = scmp.eq.s32.totalorder %s20, 7
    %p101 = por %p99, %p100
    %p102 = scmp.ne.s32.totalorder %s93, %s94
    %p103 = scmp.eq.s32.totalorder %s20, 0
    %p104 = por %p102, %p103
    %p105 = scmp.ne.s32.totalorder %s93, %s94
    %p106 = scmp.eq.s32.totalorder %s21, 7
    %p107 = por %p105, %p106
    %p109 = scmp.ne.s32.totalorder %s94, %s108
    %p110 = scmp.eq.s32.totalorder %s21, 0
    %p111 = por %p109, %p110
    %s113 = sadd.s32 %s112, 1
    %p116 = scmp.eq.s32.totalorder %s15, 7
    %p117 = scmp.ne.s32.totalorder %s112, %s114
    %p118 = scmp.eq.s32.totalorder %s15, 0
    %p119 = por %p117, %p118
    %p120 = scmp.ne.s32.totalorder %s112, %s114
    %p121 = scmp.eq.s32.totalorder %s20, 7
    %p122 = por %p120, %p121
    %p123 = scmp.ne.s32.totalorder %s114, %s115
    %p124 = scmp.eq.s32.totalorder %s20, 0
    %p125 = por %p123, %p124
    %p126 = scmp.ne.s32.totalorder %s114, %s115
    %p127 = scmp.eq.s32.totalorder %s21, 7
    %p128 = por %p126, %p127
    %p130 = scmp.ne.s32.totalorder %s115, %s129
    %p131 = scmp.eq.s32.totalorder %s21, 0
    %p132 = por %p130, %p131
    %s134 = sadd.s32 %s133, 1
    %p137 = scmp.eq.s32.totalorder %s15, 7
    %p138 = scmp.ne.s32.totalorder %s133, %s135
    %p139 = scmp.eq.s32.totalorder %s15, 0
    %p140 = por %p138, %p139
    %p141 = scmp.ne.s32.totalorder %s133, %s135
    %p142 = scmp.eq.s32.totalorder %s20, 7
    %p143 = por %p141, %p142
    %p144 = scmp.ne.s32.totalorder %s135, %s136
    %p145 = scmp.eq.s32.totalorder %s20, 0
    %p146 = por %p144, %p145
    %p147 = scmp.ne.s32.totalorder %s135, %s136
    %p148 = scmp.eq.s32.totalorder %s21, 7
    %p149 = por %p147, %p148
    %p151 = scmp.ne.s32.totalorder %s136, %s150
    %p152 = scmp.eq.s32.totalorder %s21, 0
    %p153 = por %p151, %p152
    %s155 = sadd.s32 %s154, 1
    %p158 = scmp.eq.s32.totalorder %s15, 7
    %p159 = scmp.ne.s32.totalorder %s154, %s156
    %p160 = scmp.eq.s32.totalorder %s15, 0
    %p161 = por %p159, %p160
    %p162 = scmp.ne.s32.totalorder %s154, %s156
    %p163 = scmp.eq.s32.totalorder %s20, 7
    %p164 = por %p162, %p163
    %p165 = scmp.ne.s32.totalorder %s156, %s157
    %p166 = scmp.eq.s32.totalorder %s20, 0
    %p167 = por %p165, %p166
    %p168 = scmp.ne.s32.totalorder %s156, %s157
    %p169 = scmp.eq.s32.totalorder %s21, 7
    %p170 = por %p168, %p169
    %p172 = scmp.ne.s32.totalorder %s157, %s171
    %p173 = scmp.eq.s32.totalorder %s21, 0
    %p174 = por %p172, %p173
    %s176 = sadd.s32 %s175, 1
    %p179 = scmp.eq.s32.totalorder %s15, 7
    %p180 = scmp.ne.s32.totalorder %s175, %s177
    %p181 = scmp.eq.s32.totalorder %s15, 0
    %p182 = por %p180, %p181
    %p183 = scmp.ne.s32.totalorder %s175, %s177
    %p184 = scmp.eq.s32.totalorder %s20, 7
    %p185 = por %p183, %p184
    %p186 = scmp.ne.s32.totalorder %s177, %s178
    %p187 = scmp.eq.s32.totalorder %s20, 0
    %p188 = por %p186, %p187
    %p189 = scmp.ne.s32.totalorder %s177, %s178
    %p190 = scmp.eq.s32.totalorder %s21, 7
    %p191 = por %p189, %p190
    %p193 = scmp.ne.s32.totalorder %s178, %s192
    %p194 = scmp.eq.s32.totalorder %s21, 0
    %p195 = por %p193, %p194
    %s197 = sadd.s32 %s196, 1
    %p200 = scmp.eq.s32.totalorder %s15, 7
    %p201 = scmp.ne.s32.totalorder %s196, %s198
    %p202 = scmp.eq.s32.totalorder %s15, 0
    %p203 = por %p201, %p202
    %p204 = scmp.ne.s32.totalorder %s196, %s198
    %p205 = scmp.eq.s32.totalorder %s20, 7
    %p206 = por %p204, %p205
    %p207 = scmp.ne.s32.totalorder %s198, %s199
    %p208 = scmp.eq.s32.totalorder %s20, 0
    %p209 = por %p207, %p208
    %p210 = scmp.ne.s32.totalorder %s198, %s199
    %p211 = scmp.eq.s32.totalorder %s21, 7
    %p212 = por %p210, %p211
    %p214 = scmp.ne.s32.totalorder %s199, %s213
    %p215 = scmp.eq.s32.totalorder %s21, 0
    %p216 = por %p214, %p215
    %s217 = ssub.s32 %s15, %s22
    %p218 = scmp.eq.s32.totalorder %s217, 0
    %s220 = sadd.s32 %s219, 1
    %s221 = scalar_select %p218, %s219, %s220
    %p224 = pneg %p218
    %p225 = scmp.eq.s32.totalorder %s15, 7
    %p226 = por %p224, %p225
    %p227 = scmp.ne.s32.totalorder %s219, %s222
    %p228 = scmp.eq.s32.totalorder %s15, 0
    %p229 = por %p227, %p228
    %p230 = scmp.ne.s32.totalorder %s219, %s222
    %p231 = scmp.eq.s32.totalorder %s20, 7
    %p232 = por %p230, %p231
    %p233 = scmp.ne.s32.totalorder %s222, %s223
    %p234 = scmp.eq.s32.totalorder %s20, 0
    %p235 = por %p233, %p234
    %p236 = scmp.ne.s32.totalorder %s222, %s223
    %p237 = scmp.eq.s32.totalorder %s21, 7
    %p238 = por %p236, %p237
    %p240 = scmp.ne.s32.totalorder %s223, %s239
    %p241 = scmp.eq.s32.totalorder %s21, 0
    %p242 = por %p240, %p241
    %p243 = scmp.le.s32.totalorder 1, %s15
    %p244 = scmp.lt.s32.totalorder %s15, 9
    %p245 = pnand %p243, %p244
    %p246 = pneg %p245
    // Predicated region
    $region9: #{mlp_forward.1} parent=5 // pred_check
      _
    $region10: #{mlp_forward.1} parent=5 // pred_check_branch
      %248 = sbr.rel (%p245) target = $region12
    $region11: #{mlp_forward.1} parent=5 // pred_region
      %s249 = ssub.s32 %s15, 1
      // Predicated region
      $region13: #{mlp_forward.1} parent=11 // pred_check
        %p250 = pneg %p62
      $region14: #{mlp_forward.1} parent=11 // pred_check_branch
        %252 = sbr.rel (%p250) target = $region16
      $region15: #{mlp_forward.1} parent=11 // pred_region
        _
      $region16: #{mlp_forward.1} parent=11 // pred_fallthru
        _
      // Predicated region
      $region17: #{mlp_forward.1} parent=11 // pred_check
        %p253 = pneg %p83
      $region18: #{mlp_forward.1} parent=11 // pred_check_branch
        %255 = sbr.rel (%p253) target = $region20
      $region19: #{mlp_forward.1} parent=11 // pred_region
        _
      $region20: #{mlp_forward.1} parent=11 // pred_fallthru
        _
      // Predicated region
      $region21: #{mlp_forward.1} parent=11 // pred_check
        %p256 = pneg %p104
      $region22: #{mlp_forward.1} parent=11 // pred_check_branch
        %258 = sbr.rel (%p256) target = $region24
      $region23: #{mlp_forward.1} parent=11 // pred_region
        _
      $region24: #{mlp_forward.1} parent=11 // pred_fallthru
        _
      // Predicated region
      $region25: #{mlp_forward.1} parent=11 // pred_check
        %p259 = pneg %p125
      $region26: #{mlp_forward.1} parent=11 // pred_check_branch
        %261 = sbr.rel (%p259) target = $region28
      $region27: #{mlp_forward.1} parent=11 // pred_region
        _
      $region28: #{mlp_forward.1} parent=11 // pred_fallthru
        _
      // Predicated region
      $region29: #{mlp_forward.1} parent=11 // pred_check
        %p262 = pneg %p146
      $region30: #{mlp_forward.1} parent=11 // pred_check_branch
        %264 = sbr.rel (%p262) target = $region32
      $region31: #{mlp_forward.1} parent=11 // pred_region
        _
      $region32: #{mlp_forward.1} parent=11 // pred_fallthru
        _
      // Predicated region
      $region33: #{mlp_forward.1} parent=11 // pred_check
        %p265 = pneg %p167
      $region34: #{mlp_forward.1} parent=11 // pred_check_branch
        %267 = sbr.rel (%p265) target = $region36
      $region35: #{mlp_forward.1} parent=11 // pred_region
        _
      $region36: #{mlp_forward.1} parent=11 // pred_fallthru
        _
      // Predicated region
      $region37: #{mlp_forward.1} parent=11 // pred_check
        %p268 = pneg %p188
      $region38: #{mlp_forward.1} parent=11 // pred_check_branch
        %270 = sbr.rel (%p268) target = $region40
      $region39: #{mlp_forward.1} parent=11 // pred_region
        _
      $region40: #{mlp_forward.1} parent=11 // pred_fallthru
        _
      // Predicated region
      $region41: #{mlp_forward.1} parent=11 // pred_check
        %p271 = pneg %p209
      $region42: #{mlp_forward.1} parent=11 // pred_check_branch
        %273 = sbr.rel (%p271) target = $region44
      $region43: #{mlp_forward.1} parent=11 // pred_region
        _
      $region44: #{mlp_forward.1} parent=11 // pred_fallthru
        _
    $region12: #{mlp_forward.1} parent=5 // pred_fallthru
      _
    %p274 = scmp.lt.s32.totalorder %s15, 8
    // Predicated region
    $region45: #{mlp_forward.1} parent=5 // pred_check
      %p275 = pneg %p274
    $region46: #{mlp_forward.1} parent=5 // pred_check_branch
      %277 = sbr.rel (%p275) target = $region48
    $region47: #{mlp_forward.1} parent=5 // pred_region
      // Predicated region
      $region49: #{mlp_forward.1} parent=47 // pred_check
        %p278 = pneg %p35
      $region50: #{mlp_forward.1} parent=47 // pred_check_branch
        %280 = sbr.rel (%p278) target = $region52
      $region51: #{mlp_forward.1} parent=47 // pred_region
        %s281 = smul.u32 4, %s15
        %p282 = scmp.lt.s32.totalorder %s281, 31
        %s283 = scalar_select %p282, %s281, 31
        %s284 = smul.addr %s283, 8
        %s285 = scalar_lea.vmem %s0, %s284
        %s286 = smul.u32 4, %s15
      $region52: #{mlp_forward.1} parent=47 // pred_fallthru
        _
    $region48: #{mlp_forward.1} parent=5 // pred_fallthru
      _
    %p287 = scmp.le.s32.totalorder 1, %s15
    %p288 = scmp.lt.s32.totalorder %s15, 9
    %p289 = pnand %p287, %p288
    %p290 = pneg %p289
    // Predicated region
    $region53: #{mlp_forward.1} parent=5 // pred_check
      _
    $region54: #{mlp_forward.1} parent=5 // pred_check_branch
      %292 = sbr.rel (%p289) target = $region56
    $region55: #{mlp_forward.1} parent=5 // pred_region
      %s293 = ssub.s32 %s15, 1
      %s294 = smul.u32 4, %s20
      %p295 = scmp.lt.s32.totalorder %s294, 31
      %s296 = scalar_select %p295, %s294, 31
      %s297 = smul.addr %s296, 8
      %s298 = scalar_lea.vmem %s0, %s297
      %p299 = pneg %p41
      %p300 = pneg %p38
      %p301 = pneg %p62
      %p302 = pneg %p59
      %p303 = pneg %p83
      %p304 = pneg %p80
      %p305 = pneg %p104
      %p306 = pneg %p101
      %p307 = pneg %p125
      %p308 = pneg %p122
      %p309 = pneg %p146
      %p310 = pneg %p143
      %p311 = pneg %p167
      %p312 = pneg %p164
      %p313 = pneg %p188
      %p314 = pneg %p185
      %p315 = pneg %p209
      %p316 = pneg %p206
      %p317 = pneg %p235
      %p318 = pneg %p232
      %s319 = smul.u32 4, %s20
      %p320 = scmp.lt.s32.totalorder %s319, 31
      %s321 = scalar_select %p320, %s319, 31
      %s322 = smul.addr %s321, 8
      %s323 = scalar_lea.vmem %s9, %s322
      %s324 = smul.u32 4, %s20
      %p325 = scmp.lt.s32.totalorder %s324, 31
      %s326 = scalar_select %p325, %s324, 31
      %s327 = smul.addr %s326, 8
      %s328 = scalar_lea.vmem %s0, %s327
      %s329 = smul.u32 4, %s20
      %s330 = smul.u32 4, %s20
      %p331 = scmp.lt.s32.totalorder %s330, 31
      %s332 = scalar_select %p331, %s330, 31
      %s333 = smul.addr %s332, 8
      %s334 = scalar_lea.vmem %s9, %s333
      %s335 = smul.u32 4, %s20
      %v336 = vld [vmem:[%s328] sm:$0xff]
      %v337 = vld [vmem:[%s328 + $0x8] sm:$0xff]
      %v338 = vld [vmem:[%s328 + $0x10] sm:$0xff]
      %v339 = vld [vmem:[%s328 + $0x18] sm:$0xff]
      %v340 = vld [vmem:[%s1] sm:$0xff]
      %v341 = vld [vmem:[%s1 + $0x8] sm:$0xff]
      %v342 = vld [vmem:[%s1 + $0x10] sm:$0xff]
      %v343 = vld [vmem:[%s1 + $0x18] sm:$0xff]
      %v344 = vld [vmem:[%s2] sm:$0x1]
      %v346 = vlaneseq
      %v347 = vshrl.u32 %v346, 7
      %v348 = vsub.s32 0, %v347
      %v349 = vrot.slane %v344, %v348
      %vm351 = vcmask 261120
      %v353 = vsel %vm351, %v336, 0
      %v356 = vsel %vm351, %v337, 0
      %v359 = vsel %vm351, %v338, 0
      %v362 = vsel %vm351, %v339, 0
      %364 = vmatprep.subr.mxu0 0.0
      %365 = vmatpush1.msra.mxu0 0.0
      %366 = vmatprep.subr.mxu0 0.0
      %367 = vmatpush1.msra.mxu0 0.0
      %368 = vmatprep.subr.mxu0 0.0
      %369 = vmatpush1.msra.mxu0 0.0
      %370 = vmatprep.subr.mxu0 0.0
      %371 = vmatpush1.msra.mxu0 0.0
      %372 = vmatprep.subr.mxu0 0.0
      %373 = vmatpush1.msra.mxu0 0.0
      %374 = vmatprep.subr.mxu0 0.0
      %375 = vmatpush1.msra.mxu0 0.0
      %376 = vmatprep.subr.mxu0 0.0
      %377 = vmatpush1.msra.mxu0 0.0
      %378 = vmatprep.subr.mxu0 0.0
      %379 = vmatpush1.msra.mxu0 0.0
      %380 = vmatprep.subr.mxu0 0.0
      %381 = vmatpush1.msra.mxu0 0.0
      %382 = vmatprep.subr.mxu0 0.0
      %383 = vmatpush1.msra.mxu0 0.0
      %384 = vmatprep.subr.mxu0 0.0
      %385 = vmatpush1.msra.mxu0 0.0
      %386 = vmatprep.subr.mxu0 0.0
      %387 = vmatpush1.msra.mxu0 0.0
      %388 = vmatprep.subr.mxu0 0.0
      %389 = vmatpush1.msra.mxu0 %v343
      %390 = vmatprep.subr.mxu0 0.0
      %391 = vmatpush1.msra.mxu0 %v342
      %392 = vmatprep.subr.mxu0 0.0
      %393 = vmatpush1.msra.mxu0 %v341
      %394 = vmatprep.subr.mxu0 0.0
      %395 = vmatpush1.msra.mxu0 %v340
      %396 = vmatprep.subr.mxu0 0.0
      %397 = vmatpush2.msra.mxu0 0.0
      %398 = vmatprep.subr.mxu0 0.0
      %399 = vmatpush2.msra.mxu0 0.0
      %400 = vmatprep.subr.mxu0 0.0
      %401 = vmatpush2.msra.mxu0 0.0
      %402 = vmatprep.subr.mxu0 0.0
      %403 = vmatpush2.msra.mxu0 0.0
      %404 = vmatprep.subr.mxu0 0.0
      %405 = vmatpush2.msra.mxu0 0.0
      %406 = vmatprep.subr.mxu0 0.0
      %407 = vmatpush2.msra.mxu0 0.0
      %408 = vmatprep.subr.mxu0 0.0
      %409 = vmatpush2.msra.mxu0 0.0
      %410 = vmatprep.subr.mxu0 0.0
      %411 = vmatpush2.msra.mxu0 0.0
      %412 = vmatprep.subr.mxu0 0.0
      %413 = vmatpush2.msra.mxu0 0.0
      %414 = vmatprep.subr.mxu0 0.0
      %415 = vmatpush2.msra.mxu0 0.0
      %416 = vmatprep.subr.mxu0 0.0
      %417 = vmatpush2.msra.mxu0 0.0
      %418 = vmatprep.subr.mxu0 0.0
      %419 = vmatpush2.msra.mxu0 0.0
      %420 = vmatprep.subr.mxu0 0.0
      %421 = vmatpush2.msra.mxu0 0.0
      %422 = vmatprep.subr.mxu0 0.0
      %423 = vmatpush2.msra.mxu0 0.0
      %424 = vmatprep.subr.mxu0 0.0
      %425 = vmatpush2.msra.mxu0 0.0
      %426 = vmatprep.subr.mxu0 0.0
      %427 = vmatpush2.msra.mxu0 0.0
      %428 = vmatprep.mubr.f32.mxu0 0.0
      %429 = vmatmul.mubr.f32.gmra.mxu0 %v353
      %v430 = vpop.f32.mrf.mxu0
      %v431 = vadd.f32 %v349, %v430
      %v432 = vpop.f32.mrf.mxu0
      %433 = vmatprep.mubr.f32.mxu0 0.0
      %434 = vmatmul.mubr.f32.gmra.mxu0 %v356
      %v435 = vpop.f32.mrf.mxu0
      %v436 = vadd.f32 %v349, %v435
      %v437 = vpop.f32.mrf.mxu0
      %438 = vmatprep.mubr.f32.mxu0 0.0
      %439 = vmatmul.mubr.f32.gmra.mxu0 %v359
      %v440 = vpop.f32.mrf.mxu0
      %v441 = vadd.f32 %v349, %v440
      %v442 = vpop.f32.mrf.mxu0
      %443 = vmatprep.mubr.f32.mxu0 0.0
      %444 = vmatmul.mubr.f32.gmra.mxu0 %v362
      %v445 = vpop.f32.mrf.mxu0
      %v446 = vadd.f32 %v349, %v445
      %v447 = vpop.f32.mrf.mxu0
      %448 = vdwg.mxu0
      %v449 = vmax.f32 %v431, 0.0
      %v450 = vmax.f32 %v436, 0.0
      %v451 = vmax.f32 %v441, 0.0
      %v452 = vmax.f32 %v446, 0.0
      %v453 = vld [vmem:[%s3] sm:$0xff]
      %v454 = vld [vmem:[%s3 + $0x8] sm:$0xff]
      %v455 = vld [vmem:[%s3 + $0x10] sm:$0xff]
      %v456 = vld [vmem:[%s3 + $0x18] sm:$0xff]
      %v457 = vld [vmem:[%s3 + $0x20] sm:$0xff]
      %v458 = vld [vmem:[%s3 + $0x28] sm:$0xff]
      %v459 = vld [vmem:[%s3 + $0x30] sm:$0xff]
      %v460 = vld [vmem:[%s3 + $0x38] sm:$0xff]
      %v461 = vld [vmem:[%s3 + $0x40] sm:$0xff]
      %v462 = vld [vmem:[%s3 + $0x48] sm:$0xff]
      %v463 = vld [vmem:[%s3 + $0x50] sm:$0xff]
      %v464 = vld [vmem:[%s3 + $0x58] sm:$0xff]
      %v465 = vld [vmem:[%s3 + $0x60] sm:$0xff]
      %v466 = vld [vmem:[%s3 + $0x68] sm:$0xff]
      %v467 = vld [vmem:[%s3 + $0x70] sm:$0xff]
      %v468 = vld [vmem:[%s3 + $0x78] sm:$0xff]
      %v469 = vld [vmem:[%s4] sm:$0x1]
      %v471 = vlaneseq
      %v472 = vshrl.u32 %v471, 7
      %v473 = vsub.s32 0, %v472
      %v474 = vrot.slane %v469, %v473
      %476 = vmatprep.subr.mxu0 0.0
      %477 = vmatpush1.msra.mxu0 %v468
      %478 = vmatprep.subr.mxu0 0.0
      %479 = vmatpush1.msra.mxu0 %v467
      %480 = vmatprep.subr.mxu0 0.0
      %481 = vmatpush1.msra.mxu0 %v466
      %482 = vmatprep.subr.mxu0 0.0
      %483 = vmatpush1.msra.mxu0 %v465
      %484 = vmatprep.subr.mxu0 0.0
      %485 = vmatpush1.msra.mxu0 %v464
      %486 = vmatprep.subr.mxu0 0.0
      %487 = vmatpush1.msra.mxu0 %v463
      %488 = vmatprep.subr.mxu0 0.0
      %489 = vmatpush1.msra.mxu0 %v462
      %490 = vmatprep.subr.mxu0 0.0
      %491 = vmatpush1.msra.mxu0 %v461
      %492 = vmatprep.subr.mxu0 0.0
      %493 = vmatpush1.msra.mxu0 %v460
      %494 = vmatprep.subr.mxu0 0.0
      %495 = vmatpush1.msra.mxu0 %v459
      %496 = vmatprep.subr.mxu0 0.0
      %497 = vmatpush1.msra.mxu0 %v458
      %498 = vmatprep.subr.mxu0 0.0
      %499 = vmatpush1.msra.mxu0 %v457
      %500 = vmatprep.subr.mxu0 0.0
      %501 = vmatpush1.msra.mxu0 %v456
      %502 = vmatprep.subr.mxu0 0.0
      %503 = vmatpush1.msra.mxu0 %v455
      %504 = vmatprep.subr.mxu0 0.0
      %505 = vmatpush1.msra.mxu0 %v454
      %506 = vmatprep.subr.mxu0 0.0
      %507 = vmatpush1.msra.mxu0 %v453
      %508 = vmatprep.subr.mxu0 0.0
      %509 = vmatpush2.msra.mxu0 0.0
      %510 = vmatprep.subr.mxu0 0.0
      %511 = vmatpush2.msra.mxu0 0.0
      %512 = vmatprep.subr.mxu0 0.0
      %513 = vmatpush2.msra.mxu0 0.0
      %514 = vmatprep.subr.mxu0 0.0
      %515 = vmatpush2.msra.mxu0 0.0
      %516 = vmatprep.subr.mxu0 0.0
      %517 = vmatpush2.msra.mxu0 0.0
      %518 = vmatprep.subr.mxu0 0.0
      %519 = vmatpush2.msra.mxu0 0.0
      %520 = vmatprep.subr.mxu0 0.0
      %521 = vmatpush2.msra.mxu0 0.0
      %522 = vmatprep.subr.mxu0 0.0
      %523 = vmatpush2.msra.mxu0 0.0
      %524 = vmatprep.subr.mxu0 0.0
      %525 = vmatpush2.msra.mxu0 0.0
      %526 = vmatprep.subr.mxu0 0.0
      %527 = vmatpush2.msra.mxu0 0.0
      %528 = vmatprep.subr.mxu0 0.0
      %529 = vmatpush2.msra.mxu0 0.0
      %530 = vmatprep.subr.mxu0 0.0
      %531 = vmatpush2.msra.mxu0 0.0
      %532 = vmatprep.subr.mxu0 0.0
      %533 = vmatpush2.msra.mxu0 0.0
      %534 = vmatprep.subr.mxu0 0.0
      %535 = vmatpush2.msra.mxu0 0.0
      %536 = vmatprep.subr.mxu0 0.0
      %537 = vmatpush2.msra.mxu0 0.0
      %538 = vmatprep.subr.mxu0 0.0
      %539 = vmatpush2.msra.mxu0 0.0
      %540 = vmatprep.mubr.f32.mxu0 0.0
      %541 = vmatmul.mubr.f32.gmra.mxu0 %v449
      %v542 = vpop.f32.mrf.mxu0
      %v543 = vadd.f32 %v474, %v542
      %v544 = vpop.f32.mrf.mxu0
      %545 = vmatprep.mubr.f32.mxu0 0.0
      %546 = vmatmul.mubr.f32.gmra.mxu0 %v450
      %v547 = vpop.f32.mrf.mxu0
      %v548 = vadd.f32 %v474, %v547
      %v549 = vpop.f32.mrf.mxu0
      %550 = vmatprep.mubr.f32.mxu0 0.0
      %551 = vmatmul.mubr.f32.gmra.mxu0 %v451
      %v552 = vpop.f32.mrf.mxu0
      %v553 = vadd.f32 %v474, %v552
      %v554 = vpop.f32.mrf.mxu0
      %555 = vmatprep.mubr.f32.mxu0 0.0
      %556 = vmatmul.mubr.f32.gmra.mxu0 %v452
      %v557 = vpop.f32.mrf.mxu0
      %v558 = vadd.f32 %v474, %v557
      %v559 = vpop.f32.mrf.mxu0
      %560 = vdwg.mxu0
      %v561 = vmax.f32 %v543, 0.0
      %v562 = vmax.f32 %v548, 0.0
      %v563 = vmax.f32 %v553, 0.0
      %v564 = vmax.f32 %v558, 0.0
      %v565 = vld [vmem:[%s5] sm:$0xff]
      %v566 = vld [vmem:[%s5 + $0x8] sm:$0xff]
      %v567 = vld [vmem:[%s5 + $0x10] sm:$0xff]
      %v568 = vld [vmem:[%s5 + $0x18] sm:$0xff]
      %v569 = vld [vmem:[%s5 + $0x20] sm:$0xff]
      %v570 = vld [vmem:[%s5 + $0x28] sm:$0xff]
      %v571 = vld [vmem:[%s5 + $0x30] sm:$0xff]
      %v572 = vld [vmem:[%s5 + $0x38] sm:$0xff]
      %v573 = vld [vmem:[%s5 + $0x40] sm:$0xff]
      %v574 = vld [vmem:[%s5 + $0x48] sm:$0xff]
      %v575 = vld [vmem:[%s5 + $0x50] sm:$0xff]
      %v576 = vld [vmem:[%s5 + $0x58] sm:$0xff]
      %v577 = vld [vmem:[%s5 + $0x60] sm:$0xff]
      %v578 = vld [vmem:[%s5 + $0x68] sm:$0xff]
      %v579 = vld [vmem:[%s5 + $0x70] sm:$0xff]
      %v580 = vld [vmem:[%s5 + $0x78] sm:$0xff]
      %v581 = vld [vmem:[%s6] sm:$0x1]
      %v583 = vlaneseq
      %v584 = vshrl.u32 %v583, 7
      %v585 = vsub.s32 0, %v584
      %v586 = vrot.slane %v581, %v585
      %588 = vmatprep.subr.mxu0 0.0
      %589 = vmatpush1.msra.mxu0 %v580
      %590 = vmatprep.subr.mxu0 0.0
      %591 = vmatpush1.msra.mxu0 %v579
      %592 = vmatprep.subr.mxu0 0.0
      %593 = vmatpush1.msra.mxu0 %v578
      %594 = vmatprep.subr.mxu0 0.0
      %595 = vmatpush1.msra.mxu0 %v577
      %596 = vmatprep.subr.mxu0 0.0
      %597 = vmatpush1.msra.mxu0 %v576
      %598 = vmatprep.subr.mxu0 0.0
      %599 = vmatpush1.msra.mxu0 %v575
      %600 = vmatprep.subr.mxu0 0.0
      %601 = vmatpush1.msra.mxu0 %v574
      %602 = vmatprep.subr.mxu0 0.0
      %603 = vmatpush1.msra.mxu0 %v573
      %604 = vmatprep.subr.mxu0 0.0
      %605 = vmatpush1.msra.mxu0 %v572
      %606 = vmatprep.subr.mxu0 0.0
      %607 = vmatpush1.msra.mxu0 %v571
      %608 = vmatprep.subr.mxu0 0.0
      %609 = vmatpush1.msra.mxu0 %v570
      %610 = vmatprep.subr.mxu0 0.0
      %611 = vmatpush1.msra.mxu0 %v569
      %612 = vmatprep.subr.mxu0 0.0
      %613 = vmatpush1.msra.mxu0 %v568
      %614 = vmatprep.subr.mxu0 0.0
      %615 = vmatpush1.msra.mxu0 %v567
      %616 = vmatprep.subr.mxu0 0.0
      %617 = vmatpush1.msra.mxu0 %v566
      %618 = vmatprep.subr.mxu0 0.0
      %619 = vmatpush1.msra.mxu0 %v565
      %620 = vmatprep.subr.mxu0 0.0
      %621 = vmatpush2.msra.mxu0 0.0
      %622 = vmatprep.subr.mxu0 0.0
      %623 = vmatpush2.msra.mxu0 0.0
      %624 = vmatprep.subr.mxu0 0.0
      %625 = vmatpush2.msra.mxu0 0.0
      %626 = vmatprep.subr.mxu0 0.0
      %627 = vmatpush2.msra.mxu0 0.0
      %628 = vmatprep.subr.mxu0 0.0
      %629 = vmatpush2.msra.mxu0 0.0
      %630 = vmatprep.subr.mxu0 0.0
      %631 = vmatpush2.msra.mxu0 0.0
      %632 = vmatprep.subr.mxu0 0.0
      %633 = vmatpush2.msra.mxu0 0.0
      %634 = vmatprep.subr.mxu0 0.0
      %635 = vmatpush2.msra.mxu0 0.0
      %636 = vmatprep.subr.mxu0 0.0
      %637 = vmatpush2.msra.mxu0 0.0
      %638 = vmatprep.subr.mxu0 0.0
      %639 = vmatpush2.msra.mxu0 0.0
      %640 = vmatprep.subr.mxu0 0.0
      %641 = vmatpush2.msra.mxu0 0.0
      %642 = vmatprep.subr.mxu0 0.0
      %643 = vmatpush2.msra.mxu0 0.0
      %644 = vmatprep.subr.mxu0 0.0
      %645 = vmatpush2.msra.mxu0 0.0
      %646 = vmatprep.subr.mxu0 0.0
      %647 = vmatpush2.msra.mxu0 0.0
      %648 = vmatprep.subr.mxu0 0.0
      %649 = vmatpush2.msra.mxu0 0.0
      %650 = vmatprep.subr.mxu0 0.0
      %651 = vmatpush2.msra.mxu0 0.0
      %652 = vmatprep.mubr.f32.mxu0 0.0
      %653 = vmatmul.mubr.f32.gmra.mxu0 %v561
      %v654 = vpop.f32.mrf.mxu0
      %v655 = vadd.f32 %v586, %v654
      %v656 = vpop.f32.mrf.mxu0
      %657 = vmatprep.mubr.f32.mxu0 0.0
      %658 = vmatmul.mubr.f32.gmra.mxu0 %v562
      %v659 = vpop.f32.mrf.mxu0
      %v660 = vadd.f32 %v586, %v659
      %v661 = vpop.f32.mrf.mxu0
      %662 = vmatprep.mubr.f32.mxu0 0.0
      %663 = vmatmul.mubr.f32.gmra.mxu0 %v563
      %v664 = vpop.f32.mrf.mxu0
      %v665 = vadd.f32 %v586, %v664
      %v666 = vpop.f32.mrf.mxu0
      %667 = vmatprep.mubr.f32.mxu0 0.0
      %668 = vmatmul.mubr.f32.gmra.mxu0 %v564
      %v669 = vpop.f32.mrf.mxu0
      %v670 = vadd.f32 %v586, %v669
      %v671 = vpop.f32.mrf.mxu0
      %672 = vdwg.mxu0
      %v673 = vmax.f32 %v655, 0.0
      %v674 = vmax.f32 %v660, 0.0
      %v675 = vmax.f32 %v665, 0.0
      %v676 = vmax.f32 %v670, 0.0
      %v677 = vld [vmem:[%s7] sm:$0xff]
      %v678 = vld [vmem:[%s7 + $0x8] sm:$0xff]
      %v679 = vld [vmem:[%s7 + $0x10] sm:$0xff]
      %v680 = vld [vmem:[%s7 + $0x18] sm:$0xff]
      %v681 = vld [vmem:[%s7 + $0x20] sm:$0xff]
      %v682 = vld [vmem:[%s7 + $0x28] sm:$0xff]
      %v683 = vld [vmem:[%s7 + $0x30] sm:$0xff]
      %v684 = vld [vmem:[%s7 + $0x38] sm:$0xff]
      %v685 = vld [vmem:[%s7 + $0x40] sm:$0xff]
      %v686 = vld [vmem:[%s7 + $0x48] sm:$0xff]
      %v687 = vld [vmem:[%s7 + $0x50] sm:$0xff]
      %v688 = vld [vmem:[%s7 + $0x58] sm:$0xff]
      %v689 = vld [vmem:[%s7 + $0x60] sm:$0xff]
      %v690 = vld [vmem:[%s7 + $0x68] sm:$0xff]
      %v691 = vld [vmem:[%s7 + $0x70] sm:$0xff]
      %v692 = vld [vmem:[%s7 + $0x78] sm:$0xff]
      %v693 = vld [vmem:[%s8] sm:$0x1]
      %v695 = vlaneseq
      %v696 = vshrl.u32 %v695, 7
      %v697 = vsub.s32 0, %v696
      %v698 = vrot.slane %v693, %v697
      %700 = vmatprep.subr.mxu0 0.0
      %701 = vmatpush1.msra.mxu0 %v692
      %702 = vmatprep.subr.mxu0 0.0
      %703 = vmatpush1.msra.mxu0 %v691
      %704 = vmatprep.subr.mxu0 0.0
      %705 = vmatpush1.msra.mxu0 %v690
      %706 = vmatprep.subr.mxu0 0.0
      %707 = vmatpush1.msra.mxu0 %v689
      %708 = vmatprep.subr.mxu0 0.0
      %709 = vmatpush1.msra.mxu0 %v688
      %710 = vmatprep.subr.mxu0 0.0
      %711 = vmatpush1.msra.mxu0 %v687
      %712 = vmatprep.subr.mxu0 0.0
      %713 = vmatpush1.msra.mxu0 %v686
      %714 = vmatprep.subr.mxu0 0.0
      %715 = vmatpush1.msra.mxu0 %v685
      %716 = vmatprep.subr.mxu0 0.0
      %717 = vmatpush1.msra.mxu0 %v684
      %718 = vmatprep.subr.mxu0 0.0
      %719 = vmatpush1.msra.mxu0 %v683
      %720 = vmatprep.subr.mxu0 0.0
      %721 = vmatpush1.msra.mxu0 %v682
      %722 = vmatprep.subr.mxu0 0.0
      %723 = vmatpush1.msra.mxu0 %v681
      %724 = vmatprep.subr.mxu0 0.0
      %725 = vmatpush1.msra.mxu0 %v680
      %726 = vmatprep.subr.mxu0 0.0
      %727 = vmatpush1.msra.mxu0 %v679
      %728 = vmatprep.subr.mxu0 0.0
      %729 = vmatpush1.msra.mxu0 %v678
      %730 = vmatprep.subr.mxu0 0.0
      %731 = vmatpush1.msra.mxu0 %v677
      %732 = vmatprep.subr.mxu0 0.0
      %733 = vmatpush2.msra.mxu0 0.0
      %734 = vmatprep.subr.mxu0 0.0
      %735 = vmatpush2.msra.mxu0 0.0
      %736 = vmatprep.subr.mxu0 0.0
      %737 = vmatpush2.msra.mxu0 0.0
      %738 = vmatprep.subr.mxu0 0.0
      %739 = vmatpush2.msra.mxu0 0.0
      %740 = vmatprep.subr.mxu0 0.0
      %741 = vmatpush2.msra.mxu0 0.0
      %742 = vmatprep.subr.mxu0 0.0
      %743 = vmatpush2.msra.mxu0 0.0
      %744 = vmatprep.subr.mxu0 0.0
      %745 = vmatpush2.msra.mxu0 0.0
      %746 = vmatprep.subr.mxu0 0.0
      %747 = vmatpush2.msra.mxu0 0.0
      %748 = vmatprep.subr.mxu0 0.0
      %749 = vmatpush2.msra.mxu0 0.0
      %750 = vmatprep.subr.mxu0 0.0
      %751 = vmatpush2.msra.mxu0 0.0
      %752 = vmatprep.subr.mxu0 0.0
      %753 = vmatpush2.msra.mxu0 0.0
      %754 = vmatprep.subr.mxu0 0.0
      %755 = vmatpush2.msra.mxu0 0.0
      %756 = vmatprep.subr.mxu0 0.0
      %757 = vmatpush2.msra.mxu0 0.0
      %758 = vmatprep.subr.mxu0 0.0
      %759 = vmatpush2.msra.mxu0 0.0
      %760 = vmatprep.subr.mxu0 0.0
      %761 = vmatpush2.msra.mxu0 0.0
      %762 = vmatprep.subr.mxu0 0.0
      %763 = vmatpush2.msra.mxu0 0.0
      %764 = vmatprep.mubr.f32.mxu0 0.0
      %765 = vmatmul.mubr.f32.gmra.mxu0 %v673
      %v766 = vpop.f32.mrf.mxu0
      %v767 = vadd.f32 %v698, %v766
      %v768 = vpop.f32.mrf.mxu0
      %769 = vmatprep.mubr.f32.mxu0 0.0
      %770 = vmatmul.mubr.f32.gmra.mxu0 %v674
      %v771 = vpop.f32.mrf.mxu0
      %v772 = vadd.f32 %v698, %v771
      %v773 = vpop.f32.mrf.mxu0
      %774 = vmatprep.mubr.f32.mxu0 0.0
      %775 = vmatmul.mubr.f32.gmra.mxu0 %v675
      %v776 = vpop.f32.mrf.mxu0
      %v777 = vadd.f32 %v698, %v776
      %v778 = vpop.f32.mrf.mxu0
      %779 = vmatprep.mubr.f32.mxu0 0.0
      %780 = vmatmul.mubr.f32.gmra.mxu0 %v676
      %v781 = vpop.f32.mrf.mxu0
      %v782 = vadd.f32 %v698, %v781
      %v783 = vpop.f32.mrf.mxu0
      %784 = vdwg.mxu0
      %vm785 = vcmask 130048
      %786 = vst.msk [vmem:[%s334] sm:$0xff] %vm785, %v767
      %787 = vst.msk [vmem:[%s334 + $0x8] sm:$0xff] %vm785, %v772
      %788 = vst.msk [vmem:[%s334 + $0x10] sm:$0xff] %vm785, %v777
      %789 = vst.msk [vmem:[%s334 + $0x18] sm:$0xff] %vm785, %v782
      %s790 = smul.u32 4, %s20
      %p791 = scmp.lt.s32.totalorder %s790, 31
      %s792 = scalar_select %p791, %s790, 31
      %s793 = smul.addr %s792, 8
      %s794 = scalar_lea.vmem %s9, %s793
      // Predicated region
      $region57: #{mlp_forward.1} parent=55 // pred_check
        %p795 = pneg %p232
      $region58: #{mlp_forward.1} parent=55 // pred_check_branch
        %797 = sbr.rel (%p795) target = $region60
      $region59: #{mlp_forward.1} parent=55 // pred_region
        %s798 = smul.u32 4, %s20
      $region60: #{mlp_forward.1} parent=55 // pred_fallthru
        _
    $region56: #{mlp_forward.1} parent=5 // pred_fallthru
      _
    %p799 = scmp.le.s32.totalorder 2, %s15
    // Predicated region
    $region61: #{mlp_forward.1} parent=5 // pred_check
      %p800 = pneg %p799
    $region62: #{mlp_forward.1} parent=5 // pred_check_branch
      %802 = sbr.rel (%p800) target = $region64
    $region63: #{mlp_forward.1} parent=5 // pred_region
      %s803 = ssub.s32 %s15, 2
      // Predicated region
      $region65: #{mlp_forward.1} parent=63 // pred_check
        %p804 = pneg %p238
      $region66: #{mlp_forward.1} parent=63 // pred_check_branch
        %806 = sbr.rel (%p804) target = $region68
      $region67: #{mlp_forward.1} parent=63 // pred_region
        %s807 = smul.u32 4, %s21
        %p808 = scmp.lt.s32.totalorder %s807, 31
        %s809 = scalar_select %p808, %s807, 31
        %s810 = smul.addr %s809, 8
        %s811 = scalar_lea.vmem %s9, %s810
      $region68: #{mlp_forward.1} parent=63 // pred_fallthru
        _
    $region64: #{mlp_forward.1} parent=5 // pred_fallthru
      _
  $region6: #{mlp_forward.1} parent=0 // loop_footer
    %s19 = sadd.s32 1, %s15
  $region7: #{mlp_forward.1} parent=0 // loop_footer_branch
    %14 = sbr.rel target = $region3
  $region8: #{mlp_forward.1} parent=0 // loop_exit
    _

</llo_original>
